<compile_context>
chip_gen: v6e
topology: v6e:2x2x1
jax: 0.10.0
libtpu: 0.0.40
codegen_flags: <defaults>
</compile_context>

<pallas_src>
import functools

import jax
import jax.numpy as jnp
from jax.experimental import pallas as pl
from jax.experimental.pallas import tpu as pltpu


def scse_kernel(x_ref, s_ref, wc_ref, bc_ref, o_ref):
    """One (C, T_HW) spatial tile of one batch element.

    x_ref : (C, T)  input tile (I/O dtype: f32 or bf16)
    s_ref : (C, 1)  precomputed cSE gate, f32
    wc_ref: (C, C)  1x1-conv weight in the I/O dtype (bf16-native MXU path)
    bc_ref: (C, 1)  1x1-conv bias, f32
    o_ref : (C, T)  output tile
    """
    x = x_ref[...]
    # sSE: 1x1 conv == channel matmul on the MXU, f32 accumulation.
    y = jnp.dot(wc_ref[...], x, preferred_element_type=jnp.float32) + bc_ref[...]
    # sigmoid(y) = 1 / (1 + exp(-y)): exp + approximate reciprocal (EUP slot).
    sse_gate = pl.reciprocal(1.0 + jnp.exp(-y), approx=True)          # (C, T)
    # Fused gates: o = x * (cse_gate + sse_gate) -- single elementwise pass.
    gate = s_ref[...] + sse_gate                                      # (C, T)
    o_ref[...] = (x.astype(jnp.float32) * gate).astype(o_ref.dtype)


def _pick_spatial_tile(hw, c, itemsize):
    """Largest multiple-of-128 lane tile whose double-buffered in+out blocks
    fit a conservative 16 MiB budget (safe even on v7x's 64 MiB VMEM)."""
    budget = 16 * 1024 * 1024
    t_max = budget // (4 * c * itemsize)          # 2x in + 2x out buffers
    t_max = max(128, (t_max // 128) * 128)
    hw_rounded = ((hw + 127) // 128) * 128        # lane-dense stores
    return min(t_max, hw_rounded)


@jax.jit
def scse_forward(x_nchw, w1, b1, w2, b2, wc, bc):
    B, C, H, W = x_nchw.shape
    HW = H * W
    dtype = x_nchw.dtype
    itemsize = jnp.dtype(dtype).itemsize

    # ---- cSE gate, computed once per batch outside the slab loop (f32) ----
    xf32 = x_nchw.astype(jnp.float32).reshape(B, C, HW)
    m = jnp.mean(xf32, axis=-1)                   # (B, C)
    h = jnp.maximum(m @ w1.T + b1, 0.0)           # (B, C//r)
    s = jax.nn.sigmoid(h @ w2.T + b2)             # (B, C)
    s = s.reshape(B, C, 1).astype(jnp.float32)

    # ---- lane-dense spatial tiling (multiple of 128) + zero padding ----
    T = _pick_spatial_tile(HW, C, itemsize)
    n_t = -(-HW // T)                             # cdiv
    HWp = n_t * T
    x_flat = x_nchw.reshape(B, C, HW)
    if HWp != HW:
        x_flat = jnp.pad(x_flat, ((0, 0), (0, 0), (0, HWp - HW)))

    wc_k = wc.astype(dtype)                       # feed the MXU in the I/O dtype
    bc_k = bc.astype(jnp.float32).reshape(C, 1)

    # ---- explicit scoped-VMEM budget: 2x(in) + 2x(out) blocks + weights ----
    blk_bytes = C * T * itemsize
    w_bytes = C * C * itemsize + 2 * C * 4        # wc + bc + s blocks
    vmem_bytes = 4 * blk_bytes + 4 * w_bytes + (4 << 20)
    vmem_limit = int(min(128 << 20, max(32 << 20, vmem_bytes)))

    out = pl.pallas_call(
        scse_kernel,
        out_shape=jax.ShapeDtypeStruct((B, C, HWp), dtype),
        grid_spec=pltpu.PrefetchScalarGridSpec(
            num_scalar_prefetch=0,
            grid=(B, n_t),
            in_specs=[
                pl.BlockSpec((None, C, T), lambda b, t: (b, 0, t)),   # x tile
                pl.BlockSpec((None, C, 1), lambda b, t: (b, 0, 0)),   # cSE gate
                pl.BlockSpec((C, C), lambda b, t: (0, 0)),            # conv weight
                pl.BlockSpec((C, 1), lambda b, t: (0, 0)),            # conv bias
            ],
            out_specs=pl.BlockSpec((None, C, T), lambda b, t: (b, 0, t)),
        ),
        compiler_params=pltpu.CompilerParams(
            dimension_semantics=("parallel", "parallel"),
            vmem_limit_bytes=vmem_limit,
        ),
    )(x_flat, s, wc_k, bc_k)

    return out[:, :, :HW].reshape(B, C, H, W)


def init_params(key, in_ch, r):
    """Deterministic init mimicking PyTorch defaults (uniform +-1/sqrt(fan_in))."""
    hidden = in_ch // r
    k1, k2, k3, k4, k5, k6 = jax.random.split(key, 6)

    def uni(k, shape, fan_in):
        bound = 1.0 / jnp.sqrt(fan_in)
        return jax.random.uniform(k, shape, jnp.float32, -bound, bound)

    w1 = uni(k1, (hidden, in_ch), in_ch)        # linear_1 weight (out, in)
    b1 = uni(k2, (hidden,), in_ch)
    w2 = uni(k3, (in_ch, hidden), hidden)       # linear_2 weight (out, in)
    b2 = uni(k4, (in_ch,), hidden)
    wc = uni(k5, (in_ch, in_ch), in_ch)         # conv1x1 weight, (out_ch, in_ch)
    bc = uni(k6, (in_ch,), in_ch)
    return w1, b1, w2, b2, wc, bc


def scse_reference(x, w1, b1, w2, b2, wc, bc):
    """Pure-JAX reference matching the PyTorch forward."""
    B, C, H, W = x.shape
    # cSE
    m = x.reshape(B, C, H * W).mean(-1)                     # (B, C)
    h = jnp.maximum(m @ w1.T + b1, 0.0)                     # (B, Cr)
    s = jax.nn.sigmoid(h @ w2.T + b2)                       # (B, C)
    cse = x * s[:, :, None, None]
    # sSE
    y = jnp.einsum("oc,bchw->bohw", wc, x) + bc[None, :, None, None]
    sse = x * jax.nn.sigmoid(y)
    return cse + sse


if __name__ == "__main__":
    B, C, H, W = 2, 32, 16, 16
    r = 8

    key = jax.random.PRNGKey(0)
    kx, kp = jax.random.split(key)
    x = jax.random.normal(kx, (B, C, H, W), jnp.float32)
    params = init_params(kp, C, r)

    out = jax.block_until_ready(scse_forward(x, *params))
    ref = scse_reference(x, *params)
    assert out.shape == (B, C, H, W)
    err = float(jnp.max(jnp.abs(out - ref)))
    # tolerance relaxed vs exact f32 because sigmoid uses the EUP approximate
    # reciprocal (per perf review); a real structural bug would be orders larger.
    assert err < 3e-2, f"max abs err {err}"

    # Exercise the bf16 I/O path (halves HBM traffic on v5e/v6e/v7x).
    out_bf16 = jax.block_until_ready(scse_forward(x.astype(jnp.bfloat16), *params))
    assert out_bf16.dtype == jnp.bfloat16 and out_bf16.shape == (B, C, H, W)

    print("KERNEL_OK")
</pallas_src>

<mosaic_0001>
module attributes {stable_mosaic.version = 11 : i64} {
  func.func @scse_kernel(%arg0: i32, %arg1: i32, %arg2: memref<1x32x256xf32, #tpu.memory_space<vmem>>, %arg3: memref<1x32x1xf32, #tpu.memory_space<vmem>>, %arg4: memref<32x32xf32, #tpu.memory_space<vmem>>, %arg5: memref<32x1xf32, #tpu.memory_space<vmem>>, %arg6: memref<1x32x256xf32, #tpu.memory_space<vmem>>) attributes {dimension_semantics = [#tpu.dimension_semantics<parallel>, #tpu.dimension_semantics<parallel>], iteration_bounds = array<i64: 2, 1>, scalar_prefetch = 0 : i64, scratch_operands = 0 : i64, tpu.core_type = #tpu.core_type<tc>, window_params = [{transform_indices = @transform_0, window_bounds = array<i64: 1, 32, 256>}, {transform_indices = @transform_1, window_bounds = array<i64: 1, 32, 1>}, {pipeline_mode = #tpu.pipeline_mode<synchronous>, transform_indices = @transform_2, window_bounds = array<i64: 32, 32>}, {pipeline_mode = #tpu.pipeline_mode<synchronous>, transform_indices = @transform_3, window_bounds = array<i64: 32, 1>}, {transform_indices = @transform_4, window_bounds = array<i64: 1, 32, 256>}]} {
    %c0 = arith.constant 0 : index
    %c0_0 = arith.constant 0 : index
    %c0_1 = arith.constant 0 : index
    %0 = vector.load %arg2[%c0, %c0_0, %c0_1] : memref<1x32x256xf32, #tpu.memory_space<vmem>>, vector<1x32x256xf32>
    %1 = vector.shape_cast %0 : vector<1x32x256xf32> to vector<32x256xf32>
    %c0_2 = arith.constant 0 : index
    %c0_3 = arith.constant 0 : index
    %2 = vector.load %arg4[%c0_2, %c0_3] : memref<32x32xf32, #tpu.memory_space<vmem>>, vector<32x32xf32>
    %cst = arith.constant dense<0.000000e+00> : vector<32x256xf32>
    %3 = tpu.matmul %2, %1, %cst {dimension_numbers = #tpu.dot_dimension_numbers<[1], [0], [0], [1], [0, 0, 1, 1], [], []>} : vector<32x32xf32>, vector<32x256xf32>, vector<32x256xf32> -> vector<32x256xf32>
    %c0_4 = arith.constant 0 : index
    %c0_5 = arith.constant 0 : index
    %4 = vector.load %arg5[%c0_4, %c0_5] : memref<32x1xf32, #tpu.memory_space<vmem>>, vector<32x1xf32>
    %5 = vector.broadcast %4 : vector<32x1xf32> to vector<32x256xf32>
    %6 = arith.addf %3, %5 : vector<32x256xf32>
    %cst_6 = arith.constant 0.000000e+00 : f32
    %7 = vector.broadcast %cst_6 : f32 to vector<32x256xf32>
    %8 = arith.subf %7, %6 : vector<32x256xf32>
    %9 = math.exp %8 : vector<32x256xf32>
    %cst_7 = arith.constant 1.000000e+00 : f32
    %10 = vector.broadcast %cst_7 : f32 to vector<32x256xf32>
    %11 = arith.addf %10, %9 : vector<32x256xf32>
    %12 = tpu.reciprocal %11 {approx = true} : vector<32x256xf32> -> vector<32x256xf32>
    %c0_8 = arith.constant 0 : index
    %c0_9 = arith.constant 0 : index
    %c0_10 = arith.constant 0 : index
    %13 = vector.load %arg3[%c0_8, %c0_9, %c0_10] : memref<1x32x1xf32, #tpu.memory_space<vmem>>, vector<1x32x1xf32>
    %14 = vector.shape_cast %13 : vector<1x32x1xf32> to vector<32x1xf32>
    %15 = vector.broadcast %14 : vector<32x1xf32> to vector<32x256xf32>
    %16 = arith.addf %15, %12 : vector<32x256xf32>
    %17 = arith.mulf %1, %16 : vector<32x256xf32>
    %c0_11 = arith.constant 0 : index
    %c0_12 = arith.constant 0 : index
    %c0_13 = arith.constant 0 : index
    %18 = vector.load %arg6[%c0_11, %c0_12, %c0_13] : memref<1x32x256xf32, #tpu.memory_space<vmem>>, vector<1x32x256xf32>
    %19 = vector.shape_cast %18 : vector<1x32x256xf32> to vector<32x256xf32>
    %20 = vector.shape_cast %17 : vector<32x256xf32> to vector<1x32x256xf32>
    tpu.vector_store %arg6[%c0_11, %c0_12, %c0_13], %20 {strides = array<i32>} : memref<1x32x256xf32, #tpu.memory_space<vmem>>, vector<1x32x256xf32>,
    return
  }
  func.func @transform_0(%arg0: i32, %arg1: i32) -> (i32, i32, i32) {
    %c0_i32 = arith.constant 0 : i32
    %c0_i32_0 = arith.constant 0 : i32
    return %arg0, %c0_i32, %arg1 : i32, i32, i32
  }
  func.func @transform_1(%arg0: i32, %arg1: i32) -> (i32, i32, i32) {
    %c0_i32 = arith.constant 0 : i32
    %c0_i32_0 = arith.constant 0 : i32
    %c0_i32_1 = arith.constant 0 : i32
    return %arg0, %c0_i32, %c0_i32_0 : i32, i32, i32
  }
  func.func @transform_2(%arg0: i32, %arg1: i32) -> (i32, i32) {
    %c0_i32 = arith.constant 0 : i32
    %c0_i32_0 = arith.constant 0 : i32
    %c0_i32_1 = arith.constant 0 : i32
    return %c0_i32, %c0_i32_0 : i32, i32
  }
  func.func @transform_3(%arg0: i32, %arg1: i32) -> (i32, i32) {
    %c0_i32 = arith.constant 0 : i32
    %c0_i32_0 = arith.constant 0 : i32
    %c0_i32_1 = arith.constant 0 : i32
    return %c0_i32, %c0_i32_0 : i32, i32
  }
  func.func @transform_4(%arg0: i32, %arg1: i32) -> (i32, i32, i32) {
    %c0_i32 = arith.constant 0 : i32
    %c0_i32_0 = arith.constant 0 : i32
    return %arg0, %c0_i32, %arg1 : i32, i32, i32
  }
}

</mosaic_0001>

<llo_original>
// kernel: scse_forward.1
$region0: #{scse_forward.1}
  #allocation0 [shape = 'u32[]', space=smem, size = 0x4, offset = 0x4, fixed_abs, tag = 'smem constant byte address 0x4 - core index']
  #allocation1 [shape = 'u32[144,128]{1,0:T(1,128)}', space=vmem, size = 0x12000, scoped, tag = 'internal scratch']
  %s0 = inlined_call_operand.vmem [shape: f32[2,32,256], index: 0, kind: input, shape index: {}]
  %s1 = inlined_call_operand.vmem [shape: f32[2,32,1], index: 1, kind: input, shape index: {}]
  %s2 = inlined_call_operand.vmem [shape: f32[32,32], index: 2, kind: input, shape index: {}]
  %s3 = inlined_call_operand.vmem [shape: f32[32,1], index: 3, kind: input, shape index: {}]
  %s4 = inlined_call_operand.vmem [shape: f32[2,32,256], index: 4, kind: output, shape index: {}]
  %s5 = sld [smem:[#allocation0]]
  $region49: #{scse_forward.1} parent=0
    _
  %s7 = ssub.s32 1, %s5
  %s8 = scalar_select 0, %s7, %s5
  loop: start=0, step=1, limit=4
  $region2: #{scse_forward.1} parent=0 // loop_pre_header
    _
  $region3: #{scse_forward.1} parent=0 // loop_header
    %s10 = sphi 0, %s14
    %p11 = scmp.ge.s32.totalorder %s10, 4
    %s17 = sphi 0, %s29
    %s18 = sphi 0, %s25
    %s19 = sphi 0, %s17
    %s20 = sphi 0, %s18
    %s21 = sphi 0, %s19
    %s22 = sphi 0, %s20
    %s34 = sphi 0, %s36
    %s37 = sphi 0, %s34
    %s38 = sphi 0, %s37
    %s54 = sphi 0, %s38
    %s60 = sphi 0, %s62
    %s63 = sphi 0, %s60
    %s64 = sphi 0, %s63
    %s80 = sphi 0, %s64
    %s84 = sphi 0, %s84
    %s86 = sphi 0, %s84
    %s87 = sphi 0, %s86
    %s101 = sphi 0, %s87
    %s105 = sphi 0, %s105
    %s107 = sphi 0, %s105
    %s108 = sphi 0, %s107
    %s122 = sphi 0, %s108
    %s130 = sphi 0, %s132
    %s133 = sphi 0, %s130
    %s134 = sphi 0, %s133
    %s150 = sphi 0, %s134
  $region4: #{scse_forward.1} parent=0 // loop_header_branch
    %13 = sbr.rel (%p11) target = $region8
  $region5: #{scse_forward.1} parent=0 // loop_body
    %s15 = ssub.s32 %s10, 1
    %s16 = ssub.s32 %s10, 2
    %s23 = sadd.s32 1, %s18
    %p24 = scmp.ge.s32.totalorder %s23, 1
    %s25 = scalar_select %p24, 0, %s23
    %s26 = sadd.s32 1, %s17
    %s27 = scalar_select %p24, %s26, %s17
    %p28 = scmp.ge.s32.totalorder %s27, 2
    %s29 = scalar_select %p28, 0, %s27
    %s30 = ssub.s32 %s17, %s29
    %s31 = ssub.s32 %s18, %s25
    %s32 = sor.u32 %s30, %s31
    %p33 = scmp.eq.s32.totalorder %s32, 0
    %s35 = sadd.s32 %s34, 1
    %s36 = scalar_select %p33, %s34, %s35
    %p39 = pneg %p33
    %p40 = scmp.eq.s32.totalorder %s10, 1
    %p41 = por %p39, %p40
    %p42 = scmp.ne.s32.totalorder %s34, %s37
    %p43 = scmp.eq.s32.totalorder %s10, 0
    %p44 = por %p42, %p43
    %p45 = scmp.ne.s32.totalorder %s34, %s37
    %p46 = scmp.eq.s32.totalorder %s15, 1
    %p47 = por %p45, %p46
    %p48 = scmp.ne.s32.totalorder %s37, %s38
    %p49 = scmp.eq.s32.totalorder %s15, 0
    %p50 = por %p48, %p49
    %p51 = scmp.ne.s32.totalorder %s37, %s38
    %p52 = scmp.eq.s32.totalorder %s16, 1
    %p53 = por %p51, %p52
    %p55 = scmp.ne.s32.totalorder %s38, %s54
    %p56 = scmp.eq.s32.totalorder %s16, 0
    %p57 = por %p55, %p56
    %s58 = ssub.s32 %s17, %s29
    %p59 = scmp.eq.s32.totalorder %s58, 0
    %s61 = sadd.s32 %s60, 1
    %s62 = scalar_select %p59, %s60, %s61
    %p65 = pneg %p59
    %p66 = scmp.eq.s32.totalorder %s10, 1
    %p67 = por %p65, %p66
    %p68 = scmp.ne.s32.totalorder %s60, %s63
    %p69 = scmp.eq.s32.totalorder %s10, 0
    %p70 = por %p68, %p69
    %p71 = scmp.ne.s32.totalorder %s60, %s63
    %p72 = scmp.eq.s32.totalorder %s15, 1
    %p73 = por %p71, %p72
    %p74 = scmp.ne.s32.totalorder %s63, %s64
    %p75 = scmp.eq.s32.totalorder %s15, 0
    %p76 = por %p74, %p75
    %p77 = scmp.ne.s32.totalorder %s63, %s64
    %p78 = scmp.eq.s32.totalorder %s16, 1
    %p79 = por %p77, %p78
    %p81 = scmp.ne.s32.totalorder %s64, %s80
    %p82 = scmp.eq.s32.totalorder %s16, 0
    %p83 = por %p81, %p82
    %s85 = sadd.s32 %s84, 1
    %p88 = scmp.eq.s32.totalorder %s10, 1
    %p89 = scmp.ne.s32.totalorder %s84, %s86
    %p90 = scmp.eq.s32.totalorder %s10, 0
    %p91 = por %p89, %p90
    %p92 = scmp.ne.s32.totalorder %s84, %s86
    %p93 = scmp.eq.s32.totalorder %s15, 1
    %p94 = por %p92, %p93
    %p95 = scmp.ne.s32.totalorder %s86, %s87
    %p96 = scmp.eq.s32.totalorder %s15, 0
    %p97 = por %p95, %p96
    %p98 = scmp.ne.s32.totalorder %s86, %s87
    %p99 = scmp.eq.s32.totalorder %s16, 1
    %p100 = por %p98, %p99
    %p102 = scmp.ne.s32.totalorder %s87, %s101
    %p103 = scmp.eq.s32.totalorder %s16, 0
    %p104 = por %p102, %p103
    %s106 = sadd.s32 %s105, 1
    %p109 = scmp.eq.s32.totalorder %s10, 1
    %p110 = scmp.ne.s32.totalorder %s105, %s107
    %p111 = scmp.eq.s32.totalorder %s10, 0
    %p112 = por %p110, %p111
    %p113 = scmp.ne.s32.totalorder %s105, %s107
    %p114 = scmp.eq.s32.totalorder %s15, 1
    %p115 = por %p113, %p114
    %p116 = scmp.ne.s32.totalorder %s107, %s108
    %p117 = scmp.eq.s32.totalorder %s15, 0
    %p118 = por %p116, %p117
    %p119 = scmp.ne.s32.totalorder %s107, %s108
    %p120 = scmp.eq.s32.totalorder %s16, 1
    %p121 = por %p119, %p120
    %p123 = scmp.ne.s32.totalorder %s108, %s122
    %p124 = scmp.eq.s32.totalorder %s16, 0
    %p125 = por %p123, %p124
    %s126 = ssub.s32 %s17, %s29
    %s127 = ssub.s32 %s18, %s25
    %s128 = sor.u32 %s126, %s127
    %p129 = scmp.eq.s32.totalorder %s128, 0
    %s131 = sadd.s32 %s130, 1
    %s132 = scalar_select %p129, %s130, %s131
    %p135 = pneg %p129
    %p136 = scmp.eq.s32.totalorder %s10, 1
    %p137 = por %p135, %p136
    %p138 = scmp.ne.s32.totalorder %s130, %s133
    %p139 = scmp.eq.s32.totalorder %s10, 0
    %p140 = por %p138, %p139
    %p141 = scmp.ne.s32.totalorder %s130, %s133
    %p142 = scmp.eq.s32.totalorder %s15, 1
    %p143 = por %p141, %p142
    %p144 = scmp.ne.s32.totalorder %s133, %s134
    %p145 = scmp.eq.s32.totalorder %s15, 0
    %p146 = por %p144, %p145
    %p147 = scmp.ne.s32.totalorder %s133, %s134
    %p148 = scmp.eq.s32.totalorder %s16, 1
    %p149 = por %p147, %p148
    %p151 = scmp.ne.s32.totalorder %s134, %s150
    %p152 = scmp.eq.s32.totalorder %s16, 0
    %p153 = por %p151, %p152
    %p154 = scmp.le.s32.totalorder 1, %s10
    %p155 = scmp.lt.s32.totalorder %s10, 3
    %p156 = pnand %p154, %p155
    %p157 = pneg %p156
    // Predicated region
    $region9: #{scse_forward.1} parent=5 // pred_check
      _
    $region10: #{scse_forward.1} parent=5 // pred_check_branch
      %159 = sbr.rel (%p156) target = $region12
    $region11: #{scse_forward.1} parent=5 // pred_region
      %s160 = ssub.s32 %s10, 1
      // Predicated region
      $region13: #{scse_forward.1} parent=11 // pred_check
        %p161 = pneg %p97
      $region14: #{scse_forward.1} parent=11 // pred_check_branch
        %163 = sbr.rel (%p161) target = $region16
      $region15: #{scse_forward.1} parent=11 // pred_region
        _
      $region16: #{scse_forward.1} parent=11 // pred_fallthru
        _
      // Predicated region
      $region17: #{scse_forward.1} parent=11 // pred_check
        %p164 = pneg %p118
      $region18: #{scse_forward.1} parent=11 // pred_check_branch
        %166 = sbr.rel (%p164) target = $region20
      $region19: #{scse_forward.1} parent=11 // pred_region
        _
      $region20: #{scse_forward.1} parent=11 // pred_fallthru
        _
    $region12: #{scse_forward.1} parent=5 // pred_fallthru
      _
    %p167 = scmp.lt.s32.totalorder %s10, 2
    // Predicated region
    $region21: #{scse_forward.1} parent=5 // pred_check
      %p168 = pneg %p167
    $region22: #{scse_forward.1} parent=5 // pred_check_branch
      %170 = sbr.rel (%p168) target = $region24
    $region23: #{scse_forward.1} parent=5 // pred_region
      // Predicated region
      $region25: #{scse_forward.1} parent=23 // pred_check
        %p171 = pneg %p44
      $region26: #{scse_forward.1} parent=23 // pred_check_branch
        %173 = sbr.rel (%p171) target = $region28
      $region27: #{scse_forward.1} parent=23 // pred_region
        %s174 = smul.u32 2, %s18
        %p175 = scmp.lt.s32.totalorder %s17, 1
        %s176 = scalar_select %p175, %s17, 1
        %p177 = scmp.lt.s32.totalorder %s174, 1
        %s178 = scalar_select %p177, %s174, 1
        %s179 = smul.addr %s176, 8
        %s180 = sadd.s32 %s178, %s179
        %s181 = smul.addr %s180, 8
        %s182 = scalar_lea.vmem %s0, %s181
        %s183 = smul.u32 2, %s18
      $region28: #{scse_forward.1} parent=23 // pred_fallthru
        _
      // Predicated region
      $region29: #{scse_forward.1} parent=23 // pred_check
        %p184 = pneg %p70
      $region30: #{scse_forward.1} parent=23 // pred_check_branch
        %186 = sbr.rel (%p184) target = $region32
      $region31: #{scse_forward.1} parent=23 // pred_region
        %p187 = scmp.lt.s32.totalorder %s17, 1
        %s188 = scalar_select %p187, %s17, 1
        %s189 = smul.addr %s188, 4
        %s190 = smul.addr %s189, 8
        %s191 = scalar_lea.vmem %s1, %s190
      $region32: #{scse_forward.1} parent=23 // pred_fallthru
        _
    $region24: #{scse_forward.1} parent=5 // pred_fallthru
      _
    %p192 = scmp.le.s32.totalorder 1, %s10
    %p193 = scmp.lt.s32.totalorder %s10, 3
    %p194 = pnand %p192, %p193
    %p195 = pneg %p194
    // Predicated region
    $region33: #{scse_forward.1} parent=5 // pred_check
      _
    $region34: #{scse_forward.1} parent=5 // pred_check_branch
      %197 = sbr.rel (%p194) target = $region36
    $region35: #{scse_forward.1} parent=5 // pred_region
      %s198 = ssub.s32 %s10, 1
      %s199 = smul.u32 2, %s20
      %p200 = scmp.lt.s32.totalorder %s19, 1
      %s201 = scalar_select %p200, %s19, 1
      %p202 = scmp.lt.s32.totalorder %s199, 1
      %s203 = scalar_select %p202, %s199, 1
      %s204 = smul.addr %s201, 8
      %s205 = sadd.s32 %s203, %s204
      %s206 = smul.addr %s205, 8
      %s207 = scalar_lea.vmem %s0, %s206
      %p208 = pneg %p50
      %p209 = pneg %p47
      %p210 = scmp.lt.s32.totalorder %s19, 1
      %s211 = scalar_select %p210, %s19, 1
      %s212 = smul.addr %s211, 4
      %s213 = smul.addr %s212, 8
      %s214 = scalar_lea.vmem %s1, %s213
      %p215 = pneg %p76
      %p216 = pneg %p73
      %p217 = pneg %p97
      %p218 = pneg %p94
      %p219 = pneg %p118
      %p220 = pneg %p115
      %p221 = pneg %p146
      %p222 = pneg %p143
      %s223 = smul.u32 2, %s20
      %p224 = scmp.lt.s32.totalorder %s19, 1
      %s225 = scalar_select %p224, %s19, 1
      %p226 = scmp.lt.s32.totalorder %s223, 1
      %s227 = scalar_select %p226, %s223, 1
      %s228 = smul.addr %s225, 8
      %s229 = sadd.s32 %s227, %s228
      %s230 = smul.addr %s229, 8
      %s231 = scalar_lea.vmem %s4, %s230
      %s232 = smul.u32 2, %s20
      %p233 = scmp.lt.s32.totalorder %s19, 1
      %s234 = scalar_select %p233, %s19, 1
      %p235 = scmp.lt.s32.totalorder %s232, 1
      %s236 = scalar_select %p235, %s232, 1
      %s237 = smul.addr %s234, 8
      %s238 = sadd.s32 %s236, %s237
      %s239 = smul.addr %s238, 8
      %s240 = scalar_lea.vmem %s0, %s239
      %s241 = smul.u32 2, %s20
      %p242 = scmp.lt.s32.totalorder %s19, 1
      %s243 = scalar_select %p242, %s19, 1
      %s244 = smul.addr %s243, 4
      %s245 = smul.addr %s244, 8
      %s246 = scalar_lea.vmem %s1, %s245
      %s247 = smul.u32 2, %s20
      %p248 = scmp.lt.s32.totalorder %s19, 1
      %s249 = scalar_select %p248, %s19, 1
      %p250 = scmp.lt.s32.totalorder %s247, 1
      %s251 = scalar_select %p250, %s247, 1
      %s252 = smul.addr %s249, 8
      %s253 = sadd.s32 %s251, %s252
      %s254 = smul.addr %s253, 8
      %s255 = scalar_lea.vmem %s4, %s254
      %s256 = smul.u32 2, %s20
      %v257 = vld [vmem:[%s240] sm:$0xff]
      %v258 = vld [vmem:[%s240 + $0x8] sm:$0xff]
      %v259 = vld [vmem:[%s240 + $0x10] sm:$0xff]
      %v260 = vld [vmem:[%s240 + $0x18] sm:$0xff]
      %v261 = vld [vmem:[%s240 + $0x20] sm:$0xff]
      %v262 = vld [vmem:[%s240 + $0x28] sm:$0xff]
      %v263 = vld [vmem:[%s240 + $0x30] sm:$0xff]
      %v264 = vld [vmem:[%s240 + $0x38] sm:$0xff]
      %v265 = vld [vmem:[%s2] sm:$0xff]
      %v266 = vld [vmem:[%s2 + $0x8] sm:$0xff]
      %v267 = vld [vmem:[%s2 + $0x10] sm:$0xff]
      %v268 = vld [vmem:[%s2 + $0x18] sm:$0xff]
      %v269 = vld [vmem:[%s3] sm:$0xff]
      %v270 = vld [vmem:[%s3 + $0x8] sm:$0xff]
      %v271 = vld [vmem:[%s3 + $0x10] sm:$0xff]
      %v272 = vld [vmem:[%s3 + $0x18] sm:$0xff]
      %274 = vset.pattern.permute.xlu0 0
      %275 = vperm.xlu0 %274, %v269
      %v276 = vpop.permute.xlu0 %275
      %279 = vset.pattern.permute.xlu0 0
      %280 = vperm.xlu0 %279, %v270
      %v281 = vpop.permute.xlu0 %280
      %284 = vset.pattern.permute.xlu0 0
      %285 = vperm.xlu0 %284, %v271
      %v286 = vpop.permute.xlu0 %285
      %289 = vset.pattern.permute.xlu0 0
      %290 = vperm.xlu0 %289, %v272
      %v291 = vpop.permute.xlu0 %290
      %vm293 = vcmask 261120
      %v295 = vsel %vm293, %v265, 0
      %v298 = vsel %vm293, %v266, 0
      %v301 = vsel %vm293, %v267, 0
      %v304 = vsel %vm293, %v268, 0
      %306 = vmatprep.subr.mxu0 0.0
      %307 = vmatpush1.msra.mxu0 0.0
      %308 = vmatprep.subr.mxu0 0.0
      %309 = vmatpush1.msra.mxu0 0.0
      %310 = vmatprep.subr.mxu0 0.0
      %311 = vmatpush1.msra.mxu0 0.0
      %312 = vmatprep.subr.mxu0 0.0
      %313 = vmatpush1.msra.mxu0 0.0
      %314 = vmatprep.subr.mxu0 0.0
      %315 = vmatpush1.msra.mxu0 0.0
      %316 = vmatprep.subr.mxu0 0.0
      %317 = vmatpush1.msra.mxu0 0.0
      %318 = vmatprep.subr.mxu0 0.0
      %319 = vmatpush1.msra.mxu0 0.0
      %320 = vmatprep.subr.mxu0 0.0
      %321 = vmatpush1.msra.mxu0 0.0
      %322 = vmatprep.subr.mxu0 0.0
      %323 = vmatpush1.msra.mxu0 0.0
      %324 = vmatprep.subr.mxu0 0.0
      %325 = vmatpush1.msra.mxu0 0.0
      %326 = vmatprep.subr.mxu0 0.0
      %327 = vmatpush1.msra.mxu0 0.0
      %328 = vmatprep.subr.mxu0 0.0
      %329 = vmatpush1.msra.mxu0 0.0
      %330 = vmatprep.subr.mxu0 %v264
      %331 = vmatpush1.msra.mxu0 %v263
      %332 = vmatprep.subr.mxu0 %v262
      %333 = vmatpush1.msra.mxu0 %v261
      %334 = vmatprep.subr.mxu0 %v260
      %335 = vmatpush1.msra.mxu0 %v259
      %336 = vmatprep.subr.mxu0 %v258
      %337 = vmatpush1.msra.mxu0 %v257
      %338 = vmatprep.subr.mxu0 0.0
      %339 = vmatpush2.msra.mxu0 0.0
      %340 = vmatprep.subr.mxu0 0.0
      %341 = vmatpush2.msra.mxu0 0.0
      %342 = vmatprep.subr.mxu0 0.0
      %343 = vmatpush2.msra.mxu0 0.0
      %344 = vmatprep.subr.mxu0 0.0
      %345 = vmatpush2.msra.mxu0 0.0
      %346 = vmatprep.subr.mxu0 0.0
      %347 = vmatpush2.msra.mxu0 0.0
      %348 = vmatprep.subr.mxu0 0.0
      %349 = vmatpush2.msra.mxu0 0.0
      %350 = vmatprep.subr.mxu0 0.0
      %351 = vmatpush2.msra.mxu0 0.0
      %352 = vmatprep.subr.mxu0 0.0
      %353 = vmatpush2.msra.mxu0 0.0
      %354 = vmatprep.subr.mxu0 0.0
      %355 = vmatpush2.msra.mxu0 0.0
      %356 = vmatprep.subr.mxu0 0.0
      %357 = vmatpush2.msra.mxu0 0.0
      %358 = vmatprep.subr.mxu0 0.0
      %359 = vmatpush2.msra.mxu0 0.0
      %360 = vmatprep.subr.mxu0 0.0
      %361 = vmatpush2.msra.mxu0 0.0
      %362 = vmatprep.subr.mxu0 0.0
      %363 = vmatpush2.msra.mxu0 0.0
      %364 = vmatprep.subr.mxu0 0.0
      %365 = vmatpush2.msra.mxu0 0.0
      %366 = vmatprep.subr.mxu0 0.0
      %367 = vmatpush2.msra.mxu0 0.0
      %368 = vmatprep.subr.mxu0 0.0
      %369 = vmatpush2.msra.mxu0 0.0
      %370 = vmatprep.mubr.f32.mxu0 0.0
      %371 = vmatmul.mubr.f32.gmra.mxu0 %v295
      %v372 = vpop.f32.mrf.mxu0
      %v373 = vadd.f32 %v276, %v372
      %v374 = vpop.f32.mrf.mxu0
      %v375 = vadd.f32 %v276, %v374
      %376 = vmatprep.mubr.f32.mxu0 0.0
      %377 = vmatmul.mubr.f32.gmra.mxu0 %v298
      %v378 = vpop.f32.mrf.mxu0
      %v379 = vadd.f32 %v281, %v378
      %v380 = vpop.f32.mrf.mxu0
      %v381 = vadd.f32 %v281, %v380
      %382 = vmatprep.mubr.f32.mxu0 0.0
      %383 = vmatmul.mubr.f32.gmra.mxu0 %v301
      %v384 = vpop.f32.mrf.mxu0
      %v385 = vadd.f32 %v286, %v384
      %v386 = vpop.f32.mrf.mxu0
      %v387 = vadd.f32 %v286, %v386
      %388 = vmatprep.mubr.f32.mxu0 0.0
      %389 = vmatmul.mubr.f32.gmra.mxu0 %v304
      %v390 = vpop.f32.mrf.mxu0
      %v391 = vadd.f32 %v291, %v390
      %v392 = vpop.f32.mrf.mxu0
      %v393 = vadd.f32 %v291, %v392
      %394 = vdwg.mxu0
      %v395 = vsub.f32 0.0, %v373
      %v396 = vsub.f32 0.0, %v375
      %v397 = vsub.f32 0.0, %v379
      %v398 = vsub.f32 0.0, %v381
      %v399 = vsub.f32 0.0, %v385
      %v400 = vsub.f32 0.0, %v387
      %v401 = vsub.f32 0.0, %v391
      %v402 = vsub.f32 0.0, %v393
      %v403 = vmul.f32 %v395, 1.442695
      %v404 = vpow.pop %v403
      %v405 = vmul.f32 %v396, 1.442695
      %v406 = vpow.pop %v405
      %v407 = vmul.f32 %v397, 1.442695
      %v408 = vpow.pop %v407
      %v409 = vmul.f32 %v398, 1.442695
      %v410 = vpow.pop %v409
      %v411 = vmul.f32 %v399, 1.442695
      %v412 = vpow.pop %v411
      %v413 = vmul.f32 %v400, 1.442695
      %v414 = vpow.pop %v413
      %v415 = vmul.f32 %v401, 1.442695
      %v416 = vpow.pop %v415
      %v417 = vmul.f32 %v402, 1.442695
      %v418 = vpow.pop %v417
      %v419 = vadd.f32 %v404, 1.0
      %v420 = vadd.f32 %v406, 1.0
      %v421 = vadd.f32 %v408, 1.0
      %v422 = vadd.f32 %v410, 1.0
      %v423 = vadd.f32 %v412, 1.0
      %v424 = vadd.f32 %v414, 1.0
      %v425 = vadd.f32 %v416, 1.0
      %v426 = vadd.f32 %v418, 1.0
      %v427 = vrcp.pop %v419
      %v428 = vrcp.pop %v420
      %v429 = vrcp.pop %v421
      %v430 = vrcp.pop %v422
      %v431 = vrcp.pop %v423
      %v432 = vrcp.pop %v424
      %v433 = vrcp.pop %v425
      %v434 = vrcp.pop %v426
      %v435 = vld [vmem:[%s246] sm:$0xff]
      %v436 = vld [vmem:[%s246 + $0x8] sm:$0xff]
      %v437 = vld [vmem:[%s246 + $0x10] sm:$0xff]
      %v438 = vld [vmem:[%s246 + $0x18] sm:$0xff]
      %440 = vset.pattern.permute.xlu0 0
      %441 = vperm.xlu0 %440, %v435
      %v442 = vpop.permute.xlu0 %441
      %445 = vset.pattern.permute.xlu0 0
      %446 = vperm.xlu0 %445, %v436
      %v447 = vpop.permute.xlu0 %446
      %450 = vset.pattern.permute.xlu0 0
      %451 = vperm.xlu0 %450, %v437
      %v452 = vpop.permute.xlu0 %451
      %455 = vset.pattern.permute.xlu0 0
      %456 = vperm.xlu0 %455, %v438
      %v457 = vpop.permute.xlu0 %456
      %v459 = vadd.f32 %v442, %v427
      %v460 = vadd.f32 %v442, %v428
      %v461 = vadd.f32 %v447, %v429
      %v462 = vadd.f32 %v447, %v430
      %v463 = vadd.f32 %v452, %v431
      %v464 = vadd.f32 %v452, %v432
      %v465 = vadd.f32 %v457, %v433
      %v466 = vadd.f32 %v457, %v434
      %v467 = vmul.f32 %v257, %v459
      %v468 = vmul.f32 %v258, %v460
      %v469 = vmul.f32 %v259, %v461
      %v470 = vmul.f32 %v260, %v462
      %v471 = vmul.f32 %v261, %v463
      %v472 = vmul.f32 %v262, %v464
      %v473 = vmul.f32 %v263, %v465
      %v474 = vmul.f32 %v264, %v466
      %475 = vst [vmem:[%s255] sm:$0xff] %v467
      %476 = vst [vmem:[%s255 + $0x8] sm:$0xff] %v468
      %477 = vst [vmem:[%s255 + $0x10] sm:$0xff] %v469
      %478 = vst [vmem:[%s255 + $0x18] sm:$0xff] %v470
      %479 = vst [vmem:[%s255 + $0x20] sm:$0xff] %v471
      %480 = vst [vmem:[%s255 + $0x28] sm:$0xff] %v472
      %481 = vst [vmem:[%s255 + $0x30] sm:$0xff] %v473
      %482 = vst [vmem:[%s255 + $0x38] sm:$0xff] %v474
      %s483 = smul.u32 2, %s20
      %p484 = scmp.lt.s32.totalorder %s19, 1
      %s485 = scalar_select %p484, %s19, 1
      %p486 = scmp.lt.s32.totalorder %s483, 1
      %s487 = scalar_select %p486, %s483, 1
      %s488 = smul.addr %s485, 8
      %s489 = sadd.s32 %s487, %s488
      %s490 = smul.addr %s489, 8
      %s491 = scalar_lea.vmem %s4, %s490
      // Predicated region
      $region37: #{scse_forward.1} parent=35 // pred_check
        %p492 = pneg %p143
      $region38: #{scse_forward.1} parent=35 // pred_check_branch
        %494 = sbr.rel (%p492) target = $region40
      $region39: #{scse_forward.1} parent=35 // pred_region
        %s495 = smul.u32 2, %s20
      $region40: #{scse_forward.1} parent=35 // pred_fallthru
        _
    $region36: #{scse_forward.1} parent=5 // pred_fallthru
      _
    %p496 = scmp.le.s32.totalorder 2, %s10
    // Predicated region
    $region41: #{scse_forward.1} parent=5 // pred_check
      %p497 = pneg %p496
    $region42: #{scse_forward.1} parent=5 // pred_check_branch
      %499 = sbr.rel (%p497) target = $region44
    $region43: #{scse_forward.1} parent=5 // pred_region
      %s500 = ssub.s32 %s10, 2
      // Predicated region
      $region45: #{scse_forward.1} parent=43 // pred_check
        %p501 = pneg %p149
      $region46: #{scse_forward.1} parent=43 // pred_check_branch
        %503 = sbr.rel (%p501) target = $region48
      $region47: #{scse_forward.1} parent=43 // pred_region
        %s504 = smul.u32 2, %s22
        %p505 = scmp.lt.s32.totalorder %s21, 1
        %s506 = scalar_select %p505, %s21, 1
        %p507 = scmp.lt.s32.totalorder %s504, 1
        %s508 = scalar_select %p507, %s504, 1
        %s509 = smul.addr %s506, 8
        %s510 = sadd.s32 %s508, %s509
        %s511 = smul.addr %s510, 8
        %s512 = scalar_lea.vmem %s4, %s511
      $region48: #{scse_forward.1} parent=43 // pred_fallthru
        _
    $region44: #{scse_forward.1} parent=5 // pred_fallthru
      _
  $region6: #{scse_forward.1} parent=0 // loop_footer
    %s14 = sadd.s32 1, %s10
  $region7: #{scse_forward.1} parent=0 // loop_footer_branch
    %9 = sbr.rel target = $region3
  $region8: #{scse_forward.1} parent=0 // loop_exit
    _

</llo_original>
